<compile_context>
chip_gen: v6e
topology: v6e:2x2x1
jax: 0.10.0
libtpu: 0.0.40
codegen_flags: <defaults>
</compile_context>

<pallas_src>
import jax
import jax.numpy as jnp
from jax.experimental import pallas as pl
from jax.experimental.pallas import tpu as pltpu


# ---------------------------------------------------------------------------
# Pallas kernel: tiled (M, K) @ (K, E) + bias, f32 accumulation
# ---------------------------------------------------------------------------

def _patch_proj_kernel(x_ref, w_ref, b_ref, o_ref, acc_ref):
    # x_ref: (TM, TK) bf16   w_ref: (TK, E) bf16   b_ref: (1, E) f32
    # o_ref: (TM, E)  f32    acc_ref: (TM, E) f32 scratch (resident across K)
    k = pl.program_id(1)

    @pl.when(k == 0)
    def _():
        acc_ref[...] = jnp.zeros_like(acc_ref)

    acc_ref[...] += jnp.dot(
        x_ref[...], w_ref[...], preferred_element_type=jnp.float32
    )

    @pl.when(k == pl.num_programs(1) - 1)
    def _():
        o_ref[...] = (acc_ref[...] + b_ref[...]).astype(o_ref.dtype)


def _pick_tile(total, target, align):
    """Largest multiple of `align` that divides `total` and is <= target; else total."""
    if total <= target or total % align != 0:
        return total
    t = (target // align) * align
    while t >= align:
        if total % t == 0:
            return t
        t -= align
    return total


def patch_proj_pallas(patches_bf16, w_bf16, b_f32, *, tm=None, tk=None):
    """patches (M, K) bf16  @  w (K, E) bf16  +  b (E,) f32  ->  (M, E) f32."""
    M, K = patches_bf16.shape
    K2, E = w_bf16.shape
    assert K == K2

    # Row tile: multiple of 8 (sublane) dividing M; ~256 rows keeps VMEM small
    # enough for v7x (64 MiB, double-buffered inputs) while giving good DMA
    # overlap.  K tile: whole K if it isn't 128-aligned (lane constraint),
    # otherwise a 128-multiple chunk with the f32 accumulator carrying across.
    if tm is None:
        tm = _pick_tile(M, 256, 8)
    if tk is None:
        tk = K if (K % 128 != 0) else _pick_tile(K, 512, 128)
    assert M % tm == 0 and (tm % 8 == 0 or tm == M)
    assert K % tk == 0 and (tk % 128 == 0 or tk == K)

    grid = (M // tm, K // tk)

    return pl.pallas_call(
        _patch_proj_kernel,
        out_shape=jax.ShapeDtypeStruct((M, E), jnp.float32),
        grid_spec=pltpu.PrefetchScalarGridSpec(
            num_scalar_prefetch=0,
            grid=grid,
            in_specs=[
                pl.BlockSpec((tm, tk), lambda i, k: (i, k)),
                pl.BlockSpec((tk, E), lambda i, k: (k, 0)),
                pl.BlockSpec((1, E), lambda i, k: (0, 0)),
            ],
            out_specs=pl.BlockSpec((tm, E), lambda i, k: (i, 0)),
            scratch_shapes=[pltpu.VMEM((tm, E), jnp.float32)],
        ),
        compiler_params=pltpu.CompilerParams(
            dimension_semantics=("parallel", "arbitrary")
        ),
    )(patches_bf16, w_bf16, b_f32.reshape(1, E))


# ---------------------------------------------------------------------------
# PatchEmbed forward (conv as im2col + Pallas matmul)
# ---------------------------------------------------------------------------

def patch_embed_forward(x_nchw, conv_w, conv_b, patch_size, *, tm=None):
    """x: (B, C, H, W) f32, conv_w: (E, C, p, p), conv_b: (E,) -> (B, N, E) f32."""
    B, C, H, W = x_nchw.shape
    p = patch_size
    assert H % p == 0 and W % p == 0, "input size must match patch grid"
    Hs, Ws = H // p, W // p
    E = conv_w.shape[0]

    # im2col: non-overlapping (p, p) patches, flattened channel-major (c, kh, kw)
    # to match Conv2d's (E, C, p, p) weight flattening.
    # TODO(synk): fuse this extraction into the kernel via strided index_map reads
    #             to avoid one host-side HBM pass over the image.
    patches = x_nchw.reshape(B, C, Hs, p, Ws, p)
    patches = patches.transpose(0, 2, 4, 1, 3, 5).reshape(B * Hs * Ws, C * p * p)
    w2d = conv_w.reshape(E, C * p * p).T  # (K, E)

    out = patch_proj_pallas(
        patches.astype(jnp.bfloat16),
        w2d.astype(jnp.bfloat16),
        conv_b.astype(jnp.float32),
        tm=tm,
    )
    # Row-major (Hs, Ws) patch order == flatten(2).transpose(1, 2) of the conv.
    return out.reshape(B, Hs * Ws, E)


# ---------------------------------------------------------------------------
# Pure-JAX reference (true strided conv) for correctness checking
# ---------------------------------------------------------------------------

def patch_embed_reference(x_nchw, conv_w, conv_b, patch_size):
    p = patch_size
    # Use the same bf16-rounded operands as the kernel so the comparison is
    # apples-to-apples; upcast to f32 and convolve at highest precision.
    x32 = x_nchw.astype(jnp.bfloat16).astype(jnp.float32)
    w32 = conv_w.astype(jnp.bfloat16).astype(jnp.float32)
    y = jax.lax.conv_general_dilated(
        x32, w32, window_strides=(p, p), padding="VALID",
        dimension_numbers=("NCHW", "OIHW", "NCHW"),
        precision=jax.lax.Precision.HIGHEST,
    ) + conv_b.reshape(1, -1, 1, 1)
    B, E, Hs, Ws = y.shape
    return y.reshape(B, E, Hs * Ws).transpose(0, 2, 1)  # (B, N, E)


# ---------------------------------------------------------------------------

if __name__ == "__main__":
    # Small shapes consistent with the module: B=2, in_chans=3, 16x16 image,
    # patch 4 -> 16 patches, embed_dim=128 (lane-dense output).
    B, C, H, W = 2, 3, 16, 16
    patch_size = 4
    embed_dim = 128

    key = jax.random.PRNGKey(0)
    kx, kw, kb = jax.random.split(key, 3)
    x = jax.random.normal(kx, (B, C, H, W), dtype=jnp.float32)
    conv_w = (jax.random.normal(kw, (embed_dim, C, patch_size, patch_size)) * 0.02
              ).astype(jnp.float32)
    conv_b = (jax.random.normal(kb, (embed_dim,)) * 0.02).astype(jnp.float32)

    # tm=16 -> M=32 rows split into 2 parallel row tiles (exercises the grid).
    out = patch_embed_forward(x, conv_w, conv_b, patch_size, tm=16)
    out = jax.block_until_ready(out)

    Np = (H // patch_size) * (W // patch_size)
    assert out.shape == (B, Np, embed_dim)

    ref = patch_embed_reference(x, conv_w, conv_b, patch_size)
    assert jnp.allclose(out, ref, atol=1e-3, rtol=1e-3), "mismatch vs conv reference"

    print("KERNEL_OK")
</pallas_src>

<mosaic_0001>
module attributes {stable_mosaic.version = 11 : i64} {
  func.func @_patch_proj_kernel(%arg0: i32, %arg1: i32, %arg2: memref<16x48xbf16, #tpu.memory_space<vmem>>, %arg3: memref<48x128xbf16, #tpu.memory_space<vmem>>, %arg4: memref<1x128xf32, #tpu.memory_space<vmem>>, %arg5: memref<16x128xf32, #tpu.memory_space<vmem>>, %arg6: memref<16x128xf32, #tpu.memory_space<vmem>>) attributes {dimension_semantics = [#tpu.dimension_semantics<parallel>, #tpu.dimension_semantics<arbitrary>], iteration_bounds = array<i64: 2, 1>, scalar_prefetch = 0 : i64, scratch_operands = 1 : i64, tpu.core_type = #tpu.core_type<tc>, window_params = [{transform_indices = @transform_0, window_bounds = array<i64: 16, 48>}, {transform_indices = @transform_1, window_bounds = array<i64: 48, 128>}, {pipeline_mode = #tpu.pipeline_mode<synchronous>, transform_indices = @transform_2, window_bounds = array<i64: 1, 128>}, {transform_indices = @transform_3, window_bounds = array<i64: 16, 128>}]} {
    %c0_i32 = arith.constant 0 : i32
    %0 = arith.cmpi eq, %arg1, %c0_i32 : i32
    %1 = arith.extui %0 : i1 to i32
    %c0_i32_0 = arith.constant 0 : i32
    %2 = arith.cmpi ne, %1, %c0_i32_0 : i32
    scf.if %2 {
      %cst_10 = arith.constant 0.000000e+00 : f32
      %12 = vector.broadcast %cst_10 : f32 to vector<16x128xf32>
      %c0_11 = arith.constant 0 : index
      %c0_12 = arith.constant 0 : index
      %13 = vector.load %arg6[%c0_11, %c0_12] : memref<16x128xf32, #tpu.memory_space<vmem>>, vector<16x128xf32>
      tpu.vector_store %arg6[%c0_11, %c0_12], %12 {strides = array<i32>} : memref<16x128xf32, #tpu.memory_space<vmem>>, vector<16x128xf32>,
    } else {
    }
    %c0 = arith.constant 0 : index
    %c0_1 = arith.constant 0 : index
    %3 = vector.load %arg6[%c0, %c0_1] : memref<16x128xf32, #tpu.memory_space<vmem>>, vector<16x128xf32>
    %c0_2 = arith.constant 0 : index
    %c0_3 = arith.constant 0 : index
    %4 = vector.load %arg2[%c0_2, %c0_3] : memref<16x48xbf16, #tpu.memory_space<vmem>>, vector<16x48xbf16>
    %c0_4 = arith.constant 0 : index
    %c0_5 = arith.constant 0 : index
    %5 = vector.load %arg3[%c0_4, %c0_5] : memref<48x128xbf16, #tpu.memory_space<vmem>>, vector<48x128xbf16>
    %cst = arith.constant dense<0.000000e+00> : vector<16x128xf32>
    %6 = tpu.matmul %4, %5, %cst {dimension_numbers = #tpu.dot_dimension_numbers<[1], [0], [0], [1], [0, 0, 1, 1], [], []>} : vector<16x48xbf16>, vector<48x128xbf16>, vector<16x128xf32> -> vector<16x128xf32>
    %7 = arith.addf %3, %6 : vector<16x128xf32>
    %c0_6 = arith.constant 0 : index
    %c0_7 = arith.constant 0 : index
    %8 = vector.load %arg6[%c0_6, %c0_7] : memref<16x128xf32, #tpu.memory_space<vmem>>, vector<16x128xf32>
    tpu.vector_store %arg6[%c0_6, %c0_7], %7 {strides = array<i32>} : memref<16x128xf32, #tpu.memory_space<vmem>>, vector<16x128xf32>,
    %c0_i32_8 = arith.constant 0 : i32
    %9 = arith.cmpi eq, %arg1, %c0_i32_8 : i32
    %10 = arith.extui %9 : i1 to i32
    %c0_i32_9 = arith.constant 0 : i32
    %11 = arith.cmpi ne, %10, %c0_i32_9 : i32
    scf.if %11 {
      %c0_10 = arith.constant 0 : index
      %c0_11 = arith.constant 0 : index
      %12 = vector.load %arg6[%c0_10, %c0_11] : memref<16x128xf32, #tpu.memory_space<vmem>>, vector<16x128xf32>
      %c0_12 = arith.constant 0 : index
      %c0_13 = arith.constant 0 : index
      %13 = vector.load %arg4[%c0_12, %c0_13] : memref<1x128xf32, #tpu.memory_space<vmem>>, vector<1x128xf32>
      %14 = vector.broadcast %13 : vector<1x128xf32> to vector<16x128xf32>
      %15 = arith.addf %12, %14 : vector<16x128xf32>
      %c0_14 = arith.constant 0 : index
      %c0_15 = arith.constant 0 : index
      %16 = vector.load %arg5[%c0_14, %c0_15] : memref<16x128xf32, #tpu.memory_space<vmem>>, vector<16x128xf32>
      tpu.vector_store %arg5[%c0_14, %c0_15], %15 {strides = array<i32>} : memref<16x128xf32, #tpu.memory_space<vmem>>, vector<16x128xf32>,
    } else {
    }
    return
  }
  func.func @transform_0(%arg0: i32, %arg1: i32) -> (i32, i32) {
    %c0_i32 = arith.constant 0 : i32
    return %arg0, %arg1 : i32, i32
  }
  func.func @transform_1(%arg0: i32, %arg1: i32) -> (i32, i32) {
    %c0_i32 = arith.constant 0 : i32
    %c0_i32_0 = arith.constant 0 : i32
    return %arg1, %c0_i32 : i32, i32
  }
  func.func @transform_2(%arg0: i32, %arg1: i32) -> (i32, i32) {
    %c0_i32 = arith.constant 0 : i32
    %c0_i32_0 = arith.constant 0 : i32
    %c0_i32_1 = arith.constant 0 : i32
    return %c0_i32, %c0_i32_0 : i32, i32
  }
  func.func @transform_3(%arg0: i32, %arg1: i32) -> (i32, i32) {
    %c0_i32 = arith.constant 0 : i32
    %c0_i32_0 = arith.constant 0 : i32
    return %arg0, %c0_i32 : i32, i32
  }
}

</mosaic_0001>

<llo_original>
// kernel: tpu_custom_call.1
$region0: #{tpu_custom_call.1}
  #allocation0 [shape = 'u32[]', space=smem, size = 0x4, offset = 0x4, fixed_abs, tag = 'smem constant byte address 0x4 - core index']
  #allocation1 [shape = 'u32[144,128]{1,0:T(1,128)}', space=vmem, size = 0x12000, scoped, tag = 'internal scratch']
  #allocation2 [shape = 'f32[16,128]{1,0:T(8,128)}', space=vmem, size = 0x2000, scoped, tag = 'scratch operand']
  %s0 = inlined_call_operand.hbm [shape: bf16[32,48], index: 0, kind: input, shape index: {}]
  %s1 = inlined_call_operand.hbm [shape: bf16[48,128], index: 1, kind: input, shape index: {}]
  %s2 = inlined_call_operand.vmem [shape: f32[1,128], index: 2, kind: input, shape index: {}]
  %s3 = inlined_call_operand.hbm [shape: f32[32,128], index: 3, kind: output, shape index: {}]
  %s4 = sld [smem:[#allocation0]]
  $region61: #{tpu_custom_call.1} parent=0
    _
  %s6 = ssub.s32 1, %s4
  %s7 = scalar_select 0, %s6, %s4
  $region1: #{tpu_custom_call.1} parent=0
    #allocation3 [shape = 'u8[8192]{0}', space=vmem, size = 0x2000, scoped, tag = 'input window, operand 0']
    #allocation4 [shape = 's32[2]{0}', space=sflag, size = 0x8, scoped, tag = 'scoped memory for tpu_custom_call.1']
    #allocation5 [shape = 's32[2]{0}', space=sflag, size = 0x8, scoped, tag = 'scoped memory for tpu_custom_call.1']
    #allocation6 [shape = 'u8[12288]{0}', space=vmem, size = 0x3000, scoped, tag = 'input window, operand 1, single buffered']
    #allocation7 [shape = 's32[1]{0}', space=sflag, size = 0x4, scoped, tag = 'scoped memory for tpu_custom_call.1']
    #allocation8 [shape = 'u8[16384]{0}', space=vmem, size = 0x4000, scoped, tag = 'output window, operand 0']
    %8 = vsyncpa [#allocation4], 0
    %s9 = scalar_lea.sflag [#allocation4], 1
    %10 = vsyncpa %s9, 0
    %11 = vsyncpa [#allocation7], 0
    %12 = vsyncpa [#allocation5], 0
    %s13 = scalar_lea.sflag [#allocation5], 1
    %14 = vsyncpa %s13, 0
    loop: start=0, step=1, limit=4
    $region2: #{tpu_custom_call.1} parent=1 // loop_pre_header
      _
    $region3: #{tpu_custom_call.1} parent=1 // loop_header
      %s16 = sphi 0, %s20
      %p17 = scmp.ge.s32.totalorder %s16, 4
      %s23 = sphi 0, %s35
      %s24 = sphi 0, %s31
      %s25 = sphi 0, %s23
      %s26 = sphi 0, %s24
      %s27 = sphi 0, %s25
      %s28 = sphi 0, %s26
      %s40 = sphi 0, %s42
      %s43 = sphi 0, %s40
      %s44 = sphi 0, %s43
      %s60 = sphi 0, %s44
      %s66 = sphi 0, %s68
      %s69 = sphi 0, %s66
      %s70 = sphi 0, %s69
      %s86 = sphi 0, %s70
      %s90 = sphi 0, %s90
      %s92 = sphi 0, %s90
      %s93 = sphi 0, %s92
      %s107 = sphi 0, %s93
      %s113 = sphi 0, %s115
      %s116 = sphi 0, %s113
      %s117 = sphi 0, %s116
      %s133 = sphi 0, %s117
    $region4: #{tpu_custom_call.1} parent=1 // loop_header_branch
      %19 = sbr.rel (%p17) target = $region8
    $region5: #{tpu_custom_call.1} parent=1 // loop_body
      %s21 = ssub.s32 %s16, 1
      %s22 = ssub.s32 %s16, 2
      %s29 = sadd.s32 1, %s24
      %p30 = scmp.ge.s32.totalorder %s29, 1
      %s31 = scalar_select %p30, 0, %s29
      %s32 = sadd.s32 1, %s23
      %s33 = scalar_select %p30, %s32, %s23
      %p34 = scmp.ge.s32.totalorder %s33, 2
      %s35 = scalar_select %p34, 0, %s33
      %s36 = ssub.s32 %s23, %s35
      %s37 = ssub.s32 %s24, %s31
      %s38 = sor.u32 %s36, %s37
      %p39 = scmp.eq.s32.totalorder %s38, 0
      %s41 = sadd.s32 %s40, 1
      %s42 = scalar_select %p39, %s40, %s41
      %p45 = pneg %p39
      %p46 = scmp.eq.s32.totalorder %s16, 1
      %p47 = por %p45, %p46
      %p48 = scmp.ne.s32.totalorder %s40, %s43
      %p49 = scmp.eq.s32.totalorder %s16, 0
      %p50 = por %p48, %p49
      %p51 = scmp.ne.s32.totalorder %s40, %s43
      %p52 = scmp.eq.s32.totalorder %s21, 1
      %p53 = por %p51, %p52
      %p54 = scmp.ne.s32.totalorder %s43, %s44
      %p55 = scmp.eq.s32.totalorder %s21, 0
      %p56 = por %p54, %p55
      %p57 = scmp.ne.s32.totalorder %s43, %s44
      %p58 = scmp.eq.s32.totalorder %s22, 1
      %p59 = por %p57, %p58
      %p61 = scmp.ne.s32.totalorder %s44, %s60
      %p62 = scmp.eq.s32.totalorder %s22, 0
      %p63 = por %p61, %p62
      %s64 = ssub.s32 %s24, %s31
      %p65 = scmp.eq.s32.totalorder %s64, 0
      %s67 = sadd.s32 %s66, 1
      %s68 = scalar_select %p65, %s66, %s67
      %p71 = pneg %p65
      %p72 = scmp.eq.s32.totalorder %s16, 1
      %p73 = por %p71, %p72
      %p74 = scmp.ne.s32.totalorder %s66, %s69
      %p75 = scmp.eq.s32.totalorder %s16, 0
      %p76 = por %p74, %p75
      %p77 = scmp.ne.s32.totalorder %s66, %s69
      %p78 = scmp.eq.s32.totalorder %s21, 1
      %p79 = por %p77, %p78
      %p80 = scmp.ne.s32.totalorder %s69, %s70
      %p81 = scmp.eq.s32.totalorder %s21, 0
      %p82 = por %p80, %p81
      %p83 = scmp.ne.s32.totalorder %s69, %s70
      %p84 = scmp.eq.s32.totalorder %s22, 1
      %p85 = por %p83, %p84
      %p87 = scmp.ne.s32.totalorder %s70, %s86
      %p88 = scmp.eq.s32.totalorder %s22, 0
      %p89 = por %p87, %p88
      %s91 = sadd.s32 %s90, 1
      %p94 = scmp.eq.s32.totalorder %s16, 1
      %p95 = scmp.ne.s32.totalorder %s90, %s92
      %p96 = scmp.eq.s32.totalorder %s16, 0
      %p97 = por %p95, %p96
      %p98 = scmp.ne.s32.totalorder %s90, %s92
      %p99 = scmp.eq.s32.totalorder %s21, 1
      %p100 = por %p98, %p99
      %p101 = scmp.ne.s32.totalorder %s92, %s93
      %p102 = scmp.eq.s32.totalorder %s21, 0
      %p103 = por %p101, %p102
      %p104 = scmp.ne.s32.totalorder %s92, %s93
      %p105 = scmp.eq.s32.totalorder %s22, 1
      %p106 = por %p104, %p105
      %p108 = scmp.ne.s32.totalorder %s93, %s107
      %p109 = scmp.eq.s32.totalorder %s22, 0
      %p110 = por %p108, %p109
      %s111 = ssub.s32 %s23, %s35
      %p112 = scmp.eq.s32.totalorder %s111, 0
      %s114 = sadd.s32 %s113, 1
      %s115 = scalar_select %p112, %s113, %s114
      %p118 = pneg %p112
      %p119 = scmp.eq.s32.totalorder %s16, 1
      %p120 = por %p118, %p119
      %p121 = scmp.ne.s32.totalorder %s113, %s116
      %p122 = scmp.eq.s32.totalorder %s16, 0
      %p123 = por %p121, %p122
      %p124 = scmp.ne.s32.totalorder %s113, %s116
      %p125 = scmp.eq.s32.totalorder %s21, 1
      %p126 = por %p124, %p125
      %p127 = scmp.ne.s32.totalorder %s116, %s117
      %p128 = scmp.eq.s32.totalorder %s21, 0
      %p129 = por %p127, %p128
      %p130 = scmp.ne.s32.totalorder %s116, %s117
      %p131 = scmp.eq.s32.totalorder %s22, 1
      %p132 = por %p130, %p131
      %p134 = scmp.ne.s32.totalorder %s117, %s133
      %p135 = scmp.eq.s32.totalorder %s22, 0
      %p136 = por %p134, %p135
      %p137 = scmp.le.s32.totalorder 1, %s16
      %p138 = scmp.lt.s32.totalorder %s16, 3
      %p139 = pnand %p137, %p138
      %p140 = pneg %p139
      // Predicated region
      $region9: #{tpu_custom_call.1} parent=5 // pred_check
        _
      $region10: #{tpu_custom_call.1} parent=5 // pred_check_branch
        %142 = sbr.rel (%p139) target = $region12
      $region11: #{tpu_custom_call.1} parent=5 // pred_region
        %s143 = ssub.s32 %s16, 1
        // Predicated region
        $region13: #{tpu_custom_call.1} parent=11 // pred_check
          %p144 = pneg %p82
        $region14: #{tpu_custom_call.1} parent=11 // pred_check_branch
          %146 = sbr.rel (%p144) target = $region16
        $region15: #{tpu_custom_call.1} parent=11 // pred_region
          %s147 = smul.u32 6, %s26
          %s149 = ssub.s32 384, 384
          %150 = vsyncadd [#allocation7], %s149
          %s151 = smul.addr %s147, 64
          %s152 = scalar_lea.hbm %s1, %s151
          %s153 = sshll.u32 [#allocation6], 4
          %s154 = int_to_ptr.vmem [resolvable:$true] %s153
          %159 = dma.hbm_to_vmem [thread:$0]  %s152, 384, %s154, [#allocation7], 64, 64, 4
        $region16: #{tpu_custom_call.1} parent=11 // pred_fallthru
          _
        // Predicated region
        $region17: #{tpu_custom_call.1} parent=11 // pred_check
          %p160 = pneg %p103
        $region18: #{tpu_custom_call.1} parent=11 // pred_check_branch
          %162 = sbr.rel (%p160) target = $region20
        $region19: #{tpu_custom_call.1} parent=11 // pred_region
          _
        $region20: #{tpu_custom_call.1} parent=11 // pred_fallthru
          _
      $region12: #{tpu_custom_call.1} parent=5 // pred_fallthru
        _
      %p163 = scmp.lt.s32.totalorder %s16, 2
      // Predicated region
      $region21: #{tpu_custom_call.1} parent=5 // pred_check
        %p164 = pneg %p163
      $region22: #{tpu_custom_call.1} parent=5 // pred_check_branch
        %166 = sbr.rel (%p164) target = $region24
      $region23: #{tpu_custom_call.1} parent=5 // pred_region
        // Predicated region
        $region25: #{tpu_custom_call.1} parent=23 // pred_check
          %p167 = pneg %p50
        $region26: #{tpu_custom_call.1} parent=23 // pred_check_branch
          %169 = sbr.rel (%p167) target = $region28
        $region27: #{tpu_custom_call.1} parent=23 // pred_region
          %s170 = sand.u32 %s40, 1
          %s171 = scalar_lea.sflag [#allocation4], %s170
          %s172 = sand.u32 %s40, 1
          %s173 = smul.addr %s172, 8
          %s174 = scalar_lea.vmem [#allocation3], %s173
          %s175 = smul.u32 2, %s23
          %s177 = ssub.s32 128, 128
          %178 = vsyncadd %s171, %s177
          %s179 = sadd.s32 %s24, %s175
          %s180 = smul.addr %s179, 64
          %s181 = scalar_lea.hbm %s0, %s180
          %s182 = sshll.u32 %s174, 4
          %s183 = int_to_ptr.vmem [resolvable:$true] %s182
          %188 = dma.hbm_to_vmem [thread:$0]  %s181, 128, %s183, %s171, 64, 64, 4
        $region28: #{tpu_custom_call.1} parent=23 // pred_fallthru
          _
      $region24: #{tpu_custom_call.1} parent=5 // pred_fallthru
        _
      %p189 = scmp.le.s32.totalorder 1, %s16
      %p190 = scmp.lt.s32.totalorder %s16, 3
      %p191 = pnand %p189, %p190
      %p192 = pneg %p191
      // Predicated region
      $region29: #{tpu_custom_call.1} parent=5 // pred_check
        _
      $region30: #{tpu_custom_call.1} parent=5 // pred_check_branch
        %194 = sbr.rel (%p191) target = $region32
      $region31: #{tpu_custom_call.1} parent=5 // pred_region
        %s195 = ssub.s32 %s16, 1
        %s196 = sand.u32 %s43, 1
        %s197 = scalar_lea.sflag [#allocation4], %s196
        %s198 = sand.u32 %s43, 1
        %s199 = smul.addr %s198, 8
        %s200 = scalar_lea.vmem [#allocation3], %s199
        // Predicated region
        $region33: #{tpu_custom_call.1} parent=31 // pred_check
          %p201 = pneg %p56
        $region34: #{tpu_custom_call.1} parent=31 // pred_check_branch
          %203 = sbr.rel (%p201) target = $region36
        $region35: #{tpu_custom_call.1} parent=31 // pred_region
          %204 = dma.done %s197, 128
        $region36: #{tpu_custom_call.1} parent=31 // pred_fallthru
          _
        // Predicated region
        $region37: #{tpu_custom_call.1} parent=31 // pred_check
          %p205 = pneg %p82
        $region38: #{tpu_custom_call.1} parent=31 // pred_check_branch
          %207 = sbr.rel (%p205) target = $region40
        $region39: #{tpu_custom_call.1} parent=31 // pred_region
          %208 = dma.done [#allocation7], 384
        $region40: #{tpu_custom_call.1} parent=31 // pred_fallthru
          _
        %s209 = sand.u32 %s43, 1
        %s210 = scalar_lea.sflag [#allocation4], %s209
        %s211 = sand.u32 %s43, 1
        %s212 = smul.addr %s211, 8
        %s213 = scalar_lea.vmem [#allocation3], %s212
        %p214 = pneg %p56
        %p215 = pneg %p53
        %p216 = pneg %p82
        %p217 = pneg %p79
        %p218 = pneg %p103
        %p219 = pneg %p100
        %p220 = pneg %p129
        %p221 = pneg %p126
        %s222 = sand.u32 %s116, 1
        %s223 = scalar_lea.sflag [#allocation5], %s222
        %s224 = sand.u32 %s116, 1
        %s225 = smul.addr %s224, 16
        %s226 = scalar_lea.vmem [#allocation8], %s225
        %s227 = smul.u32 2, %s25
        %s228 = smul.u32 6, %s26
        %s229 = smul.u32 2, %s25
        %p231 = scmp.eq.s32.totalorder %s26, 0
        // Predicated region
        $region41: #{tpu_custom_call.1} parent=31 // pred_check
          %p232 = pneg %p231
        $region42: #{tpu_custom_call.1} parent=31 // pred_check_branch
          %234 = sbr.rel (%p232) target = $region44
        $region43: #{tpu_custom_call.1} parent=31 // pred_region
          %235 = vst [vmem:[#allocation2] sm:$0xff] 0.0
          %236 = vst [vmem:[#allocation2 + $0x8] sm:$0xff] 0.0
        $region44: #{tpu_custom_call.1} parent=31 // pred_fallthru
          _
        %v237 = vld [vmem:[#allocation2] sm:$0xff]
        %v238 = vld [vmem:[#allocation2 + $0x8] sm:$0xff]
        %v239 = vld [vmem:[%s200] sm:$0xf]
        %v240 = vld [vmem:[%s200 + $0x4] sm:$0xf]
        %v241 = vld [vmem:[#allocation6] sm:$0xf]
        %v242 = vld [vmem:[#allocation6 + $0x4] sm:$0xf]
        %v243 = vld [vmem:[#allocation6 + $0x8] sm:$0xf]
        %v244 = vld [vmem:[#allocation6 + $0xc] sm:$0xf]
        %v245 = vld [vmem:[#allocation6 + $0x10] sm:$0xf]
        %v246 = vld [vmem:[#allocation6 + $0x14] sm:$0xf]
        %v249 = vunpack.c.l.b16 %v239
        %v250 = vunpack.c.l.b16 %v240
        %v251 = vpack.c.b16 %v250, %v249
        %v258 = vunpack.c.l.b16 %v241
        %v259 = vunpack.c.l.b16 %v242
        %v260 = vunpack.c.l.b16 %v243
        %v261 = vunpack.c.l.b16 %v244
        %v262 = vunpack.c.l.b16 %v245
        %v263 = vunpack.c.l.b16 %v246
        %v264 = vpack.c.b16 %v259, %v258
        %v265 = vpack.c.b16 %v261, %v260
        %v266 = vpack.c.b16 %v263, %v262
        %vm270 = vcmask 392192
        %v272 = vsel %vm270, %v251, 0
        %274 = vmatprep.subr.bf16.mxu0 0
        %275 = vmatpush1.bf16.msra.mxu0 0
        %276 = vmatprep.subr.bf16.mxu0 0
        %277 = vmatpush1.bf16.msra.mxu0 0
        %278 = vmatprep.subr.bf16.mxu0 0
        %279 = vmatpush1.bf16.msra.mxu0 0
        %280 = vmatprep.subr.bf16.mxu0 0
        %281 = vmatpush1.bf16.msra.mxu0 0
        %282 = vmatprep.subr.bf16.mxu0 0
        %283 = vmatpush1.bf16.msra.mxu0 0
        %284 = vmatprep.subr.bf16.mxu0 0
        %285 = vmatpush1.bf16.msra.mxu0 %v266
        %286 = vmatprep.subr.bf16.mxu0 0
        %287 = vmatpush1.bf16.msra.mxu0 %v265
        %288 = vmatprep.subr.bf16.mxu0 0
        %289 = vmatpush1.bf16.msra.mxu0 %v264
        %290 = vmatprep.subr.bf16.mxu0 0
        %291 = vmatpush2.bf16.msra.mxu0 0
        %292 = vmatprep.subr.bf16.mxu0 0
        %293 = vmatpush2.bf16.msra.mxu0 0
        %294 = vmatprep.subr.bf16.mxu0 0
        %295 = vmatpush2.bf16.msra.mxu0 0
        %296 = vmatprep.subr.bf16.mxu0 0
        %297 = vmatpush2.bf16.msra.mxu0 0
        %298 = vmatprep.subr.bf16.mxu0 0
        %299 = vmatpush2.bf16.msra.mxu0 0
        %300 = vmatprep.subr.bf16.mxu0 0
        %301 = vmatpush2.bf16.msra.mxu0 0
        %302 = vmatprep.subr.bf16.mxu0 0
        %303 = vmatpush2.bf16.msra.mxu0 0
        %304 = vmatprep.subr.bf16.mxu0 0
        %305 = vmatpush2.bf16.msra.mxu0 0
        %306 = vmatprep.mubr.bf16.mxu0 0
        %307 = vmatmul.mubr.bf16.gmra.mxu0 %v272
        %v308 = vpop.f32.mrf.mxu0
        %v309 = vadd.f32 0.0, %v308
        %v310 = vpop.f32.mrf.mxu0
        %v311 = vpop.f32.mrf.mxu0
        %v312 = vadd.f32 0.0, %v311
        %v313 = vpop.f32.mrf.mxu0
        %314 = vdwg.mxu0
        %v315 = vadd.f32 %v237, %v309
        %v316 = vadd.f32 %v238, %v312
        %317 = vst [vmem:[#allocation2] sm:$0xff] %v315
        %318 = vst [vmem:[#allocation2 + $0x8] sm:$0xff] %v316
        // Predicated region
        $region45: #{tpu_custom_call.1} parent=31 // pred_check
          %p319 = pneg %p231
        $region46: #{tpu_custom_call.1} parent=31 // pred_check_branch
          %321 = sbr.rel (%p319) target = $region48
        $region47: #{tpu_custom_call.1} parent=31 // pred_region
          %v322 = vld [vmem:[#allocation2] sm:$0xff]
          %v323 = vld [vmem:[#allocation2 + $0x8] sm:$0xff]
          %v324 = vld [vmem:[%s2] sm:$0x1]
          %v326 = vlaneseq
          %v327 = vshrl.u32 %v326, 7
          %v328 = vsub.s32 0, %v327
          %v329 = vrot.slane %v324, %v328
          %v331 = vadd.f32 %v322, %v329
          %v332 = vadd.f32 %v323, %v329
          %333 = vst [vmem:[%s226] sm:$0xff] %v331
          %334 = vst [vmem:[%s226 + $0x8] sm:$0xff] %v332
        $region48: #{tpu_custom_call.1} parent=31 // pred_fallthru
          _
        %s335 = sand.u32 %s116, 1
        %s336 = scalar_lea.sflag [#allocation5], %s335
        %s337 = sand.u32 %s116, 1
        %s338 = smul.addr %s337, 16
        %s339 = scalar_lea.vmem [#allocation8], %s338
        // Predicated region
        $region49: #{tpu_custom_call.1} parent=31 // pred_check
          %p340 = pneg %p126
        $region50: #{tpu_custom_call.1} parent=31 // pred_check_branch
          %342 = sbr.rel (%p340) target = $region52
        $region51: #{tpu_custom_call.1} parent=31 // pred_region
          %s343 = smul.u32 2, %s25
          %s345 = ssub.s32 256, 256
          %346 = vsyncadd %s336, %s345
          %s347 = smul.addr %s343, 128
          %s348 = scalar_lea.hbm %s3, %s347
          %s349 = sshll.u32 %s339, 4
          %s350 = int_to_ptr.vmem [resolvable:$true] %s349
          %355 = dma.vmem_to_hbm [thread:$0]  %s350, 256, %s348, %s336, 128, 128, 8
        $region52: #{tpu_custom_call.1} parent=31 // pred_fallthru
          _
      $region32: #{tpu_custom_call.1} parent=5 // pred_fallthru
        _
      %p356 = scmp.le.s32.totalorder 2, %s16
      // Predicated region
      $region53: #{tpu_custom_call.1} parent=5 // pred_check
        %p357 = pneg %p356
      $region54: #{tpu_custom_call.1} parent=5 // pred_check_branch
        %359 = sbr.rel (%p357) target = $region56
      $region55: #{tpu_custom_call.1} parent=5 // pred_region
        %s360 = ssub.s32 %s16, 2
        // Predicated region
        $region57: #{tpu_custom_call.1} parent=55 // pred_check
          %p361 = pneg %p132
        $region58: #{tpu_custom_call.1} parent=55 // pred_check_branch
          %363 = sbr.rel (%p361) target = $region60
        $region59: #{tpu_custom_call.1} parent=55 // pred_region
          %s364 = sand.u32 %s117, 1
          %s365 = scalar_lea.sflag [#allocation5], %s364
          %s366 = sand.u32 %s117, 1
          %s367 = smul.addr %s366, 16
          %s368 = scalar_lea.vmem [#allocation8], %s367
          %369 = dma.done %s365, 256
        $region60: #{tpu_custom_call.1} parent=55 // pred_fallthru
          _
      $region56: #{tpu_custom_call.1} parent=5 // pred_fallthru
        _
    $region6: #{tpu_custom_call.1} parent=1 // loop_footer
      %s20 = sadd.s32 1, %s16
    $region7: #{tpu_custom_call.1} parent=1 // loop_footer_branch
      %15 = sbr.rel target = $region3
    $region8: #{tpu_custom_call.1} parent=1 // loop_exit
      _
    %370 = vsyncpa [#allocation4], 1
    %s371 = scalar_lea.sflag [#allocation4], 1
    %372 = vsyncpa %s371, 1
    %373 = vsyncpa [#allocation7], 1
    %374 = vsyncpa [#allocation5], 1
    %s375 = scalar_lea.sflag [#allocation5], 1
    %376 = vsyncpa %s375, 1

</llo_original>
